<compile_context>
chip_gen: v5e
topology: v5e:2x2
jax: 0.10.0
libtpu: 0.0.40
codegen_flags: <defaults>
</compile_context>

<pallas_src>
import functools

import jax
import jax.numpy as jnp
from jax.experimental import pallas as pl
from jax.experimental.pallas import tpu as pltpu


def _round_up(n, m):
    return ((n + m - 1) // m) * m


def _cdiv(a, b):
    return (a + b - 1) // b


def _layernorm_kernel(x_ref, w_ref, b_ref, o_ref, *, eps, d_model, d_pad):
    # x_ref: (row_tile, d_pad) tile of rows; w_ref/b_ref: (1, d_pad)
    x = x_ref[...].astype(jnp.float32)

    if d_pad == d_model:
        # Lane-dense case: plain reductions over the full (last) axis.
        mean = jnp.mean(x, axis=-1, keepdims=True)
        var = jnp.sum(jnp.square(x - mean), axis=-1, keepdims=True) * (
            1.0 / (d_model - 1)
        )
    else:
        # Feature axis was padded to a multiple of 128 in the wrapper; mask the
        # reduction so padded lanes don't contaminate the statistics.
        lane = jax.lax.broadcasted_iota(jnp.int32, x.shape, x.ndim - 1)
        valid = lane < d_model
        mean = jnp.sum(jnp.where(valid, x, 0.0), axis=-1, keepdims=True) * (
            1.0 / d_model
        )
        var = jnp.sum(
            jnp.square(jnp.where(valid, x - mean, 0.0)), axis=-1, keepdims=True
        ) * (1.0 / (d_model - 1))

    # Unbiased std; module divides by (std + eps). Exact reciprocal (approx=False)
    # keeps results within 1e-5 of the divide-based reference; per-row recip +
    # VPU multiply instead of a full-tile divide.
    inv = pl.reciprocal(jnp.sqrt(var) + eps, approx=False)

    # Recompute (x - mean) here instead of holding a full-tile `diff` temporary
    # live across the variance reduction (fewer VMEM load/store passes).
    y = (
        w_ref[...].astype(jnp.float32) * ((x - mean) * inv)
        + b_ref[...].astype(jnp.float32)
    )
    o_ref[...] = y.astype(o_ref.dtype)


def layer_norm(x, weight, bias, eps=1e-07, *, row_tile=None):
    """LayerNorm over the last axis of x, matching the PyTorch module."""
    orig_shape = x.shape
    d_model = int(orig_shape[-1])
    assert d_model > 1, "unbiased std requires d_model > 1"

    x2 = x.reshape(-1, d_model)
    n_rows = int(x2.shape[0])
    itemsize = jnp.dtype(x.dtype).itemsize
    # dtype-aware sublane packing: f32 -> 8, bf16/f16 -> 16, int8/fp8 -> 32
    sublane_mult = {4: 8, 2: 16, 1: 32}.get(itemsize, 8)

    # Lane-dense output: pad the feature axis once to a multiple of 128 (no-op for
    # the primary multiple-of-128 case) and mask the reduction in-kernel.
    d_pad = _round_up(d_model, 128)
    w2 = weight.reshape(1, d_model)
    b2 = bias.reshape(1, d_model)
    if d_pad != d_model:
        fpad = d_pad - d_model
        x2 = jnp.pad(x2, ((0, 0), (0, fpad)))
        w2 = jnp.pad(w2, ((0, 0), (0, fpad)))
        b2 = jnp.pad(b2, ((0, 0), (0, fpad)))

    # Per-generation VMEM capacity (64 MiB/TC on v7x, 128 MiB on v5e/v6e).
    try:
        vmem_cap = int(pltpu.get_tpu_info().vmem_capacity_bytes)
    except Exception:
        vmem_cap = 64 * 1024 * 1024  # conservative fallback (v7x per-TC)
    small_vmem = vmem_cap <= 64 * 1024 * 1024
    tile_budget = (16 if small_vmem else 24) * 1024 * 1024

    if row_tile is None:
        if n_rows < sublane_mult:
            # Full-extent single block (block_shape equal to array dim is allowed).
            row_tile = n_rows
        else:
            # Footprint per row: double-buffered in+out tiles plus ~3 f32 full-tile
            # intermediates (f32 cast of x, centered value, y) in the kernel body.
            bytes_per_row = (2 * 2 * itemsize + 3 * 4) * d_pad
            max_rows = max(sublane_mult, tile_budget // bytes_per_row)
            row_tile = min(512, max_rows)
            # Keep >= ~4 grid steps when the row count allows, so both TCs on v7x
            # get work and prefetch/writeback can overlap compute.
            target = _round_up(_cdiv(n_rows, 4), sublane_mult)
            row_tile = min(row_tile, max(target, sublane_mult))
            row_tile = max(sublane_mult, (row_tile // sublane_mult) * sublane_mult)

    # Ragged last block (if n_rows % row_tile != 0) is handled by Pallas: junk rows
    # compute independently and their OOB writes are clipped — no wrapper pad/slice.
    grid_rows = _cdiv(n_rows, row_tile)

    vmem_needed = (
        2 * 2 * row_tile * d_pad * itemsize  # double-buffered in + out tiles
        + 3 * row_tile * d_pad * 4           # f32 intermediates in the body
        + 2 * 2 * d_pad * 4                  # (double-buffered) weight + bias
    )
    vmem_cap_frac = vmem_cap * 5 // 8        # ~40 MiB on v7x, ~80 MiB on v5e/v6e
    vmem_limit = int(min(max(vmem_needed + (4 << 20), 32 << 20), vmem_cap_frac))

    cost = pl.CostEstimate(
        flops=8 * n_rows * d_pad,
        transcendentals=2 * n_rows,  # sqrt + reciprocal per row
        bytes_accessed=2 * n_rows * d_pad * itemsize + 2 * d_pad * 4,
    )

    kernel = functools.partial(
        _layernorm_kernel, eps=eps, d_model=d_model, d_pad=d_pad
    )

    out = pl.pallas_call(
        kernel,
        out_shape=jax.ShapeDtypeStruct((n_rows, d_pad), x.dtype),
        grid_spec=pltpu.PrefetchScalarGridSpec(
            num_scalar_prefetch=0,
            grid=(grid_rows,),
            in_specs=[
                pl.BlockSpec((row_tile, d_pad), lambda i: (i, 0)),
                pl.BlockSpec((1, d_pad), lambda i: (0, 0)),
                pl.BlockSpec((1, d_pad), lambda i: (0, 0)),
            ],
            out_specs=pl.BlockSpec((row_tile, d_pad), lambda i: (i, 0)),
        ),
        compiler_params=pltpu.CompilerParams(
            # Shards the row grid across the 2 TensorCores on v7x; harmless on
            # single-TC v5e/v6e.
            dimension_semantics=("parallel",),
            vmem_limit_bytes=vmem_limit,
        ),
        cost_estimate=cost,
    )(x2, w2, b2)

    if d_pad != d_model:
        out = out[:, :d_model]
    return out.reshape(orig_shape)


def _reference(x, weight, bias, eps):
    d_model = x.shape[-1]
    mean = jnp.mean(x, axis=-1, keepdims=True)
    var = jnp.sum((x - mean) ** 2, axis=-1, keepdims=True) / (d_model - 1)
    return weight * ((x - mean) / (jnp.sqrt(var) + eps)) + bias


if __name__ == "__main__":
    eps = 1e-07
    key = jax.random.PRNGKey(0)

    # Small shape consistent with the module's forward (batch, seq, d_model).
    # d_model=32 (< 128) exercises the feature-pad + masked-reduction path.
    batch, seq, d_model = 2, 8, 32
    k1, k2 = jax.random.split(key)
    x = jax.random.normal(k1, (batch, seq, d_model), dtype=jnp.float32)
    weight = jnp.ones((d_model,), dtype=jnp.float32)
    bias = jnp.zeros((d_model,), dtype=jnp.float32)

    out = jax.block_until_ready(layer_norm(x, weight, bias, eps=eps))
    ref = _reference(x, weight, bias, eps)
    assert out.shape == x.shape and out.dtype == x.dtype
    assert jnp.allclose(out, ref, atol=1e-5, rtol=1e-5)

    # Second check: lane-dense d_model (multiple of 128) and a row count (21) that
    # is NOT a multiple of the row tile -> exercises the ragged last block path.
    b2_, s2_, d2_ = 3, 7, 128
    x2 = jax.random.normal(k2, (b2_, s2_, d2_), dtype=jnp.float32)
    w2 = jnp.ones((d2_,), dtype=jnp.float32)
    bz = jnp.zeros((d2_,), dtype=jnp.float32)
    out2 = jax.block_until_ready(layer_norm(x2, w2, bz, eps=eps))
    ref2 = _reference(x2, w2, bz, eps)
    assert out2.shape == x2.shape and out2.dtype == x2.dtype
    assert jnp.allclose(out2, ref2, atol=1e-5, rtol=1e-5)

    print("KERNEL_OK")
</pallas_src>

<mosaic_0001>
module attributes {stable_mosaic.version = 11 : i64} {
  func.func @_layernorm_kernel(%arg0: i32, %arg1: memref<8x128xf32, #tpu.memory_space<vmem>>, %arg2: memref<1x128xf32, #tpu.memory_space<vmem>>, %arg3: memref<1x128xf32, #tpu.memory_space<vmem>>, %arg4: memref<8x128xf32, #tpu.memory_space<vmem>>) attributes {dimension_semantics = [#tpu.dimension_semantics<parallel>], iteration_bounds = array<i64: 2>, scalar_prefetch = 0 : i64, scratch_operands = 0 : i64, tpu.core_type = #tpu.core_type<tc>, window_params = [{transform_indices = @transform_0, window_bounds = array<i64: 8, 128>}, {pipeline_mode = #tpu.pipeline_mode<synchronous>, transform_indices = @transform_1, window_bounds = array<i64: 1, 128>}, {pipeline_mode = #tpu.pipeline_mode<synchronous>, transform_indices = @transform_2, window_bounds = array<i64: 1, 128>}, {transform_indices = @transform_3, window_bounds = array<i64: 8, 128>}]} {
    %c0 = arith.constant 0 : index
    %c0_0 = arith.constant 0 : index
    %0 = vector.load %arg1[%c0, %c0_0] : memref<8x128xf32, #tpu.memory_space<vmem>>, vector<8x128xf32>
    %1 = tpu.iota {dimensions = array<i32: 1>} : vector<8x128xi32>
    %c32_i32 = arith.constant 32 : i32
    %2 = vector.broadcast %c32_i32 : i32 to vector<8x128xi32>
    %3 = arith.cmpi slt, %1, %2 : vector<8x128xi32>
    %cst = arith.constant 0.000000e+00 : f32
    %4 = vector.broadcast %cst : f32 to vector<8x128xf32>
    %5 = arith.select %3, %0, %4 : vector<8x128xi1>, vector<8x128xf32>
    %cst_1 = arith.constant dense<0.000000e+00> : vector<8xf32>
    %6 = vector.multi_reduction <add>, %5, %cst_1 [1] : vector<8x128xf32> to vector<8xf32>
    %7 = vector.shape_cast %6 : vector<8xf32> to vector<8x1xf32>
    %cst_2 = arith.constant 3.125000e-02 : f32
    %8 = vector.broadcast %cst_2 : f32 to vector<8x1xf32>
    %9 = arith.mulf %7, %8 : vector<8x1xf32>
    %10 = vector.broadcast %9 : vector<8x1xf32> to vector<8x128xf32>
    %11 = arith.subf %0, %10 : vector<8x128xf32>
    %cst_3 = arith.constant 0.000000e+00 : f32
    %12 = vector.broadcast %cst_3 : f32 to vector<8x128xf32>
    %13 = arith.select %3, %11, %12 : vector<8x128xi1>, vector<8x128xf32>
    %14 = arith.mulf %13, %13 : vector<8x128xf32>
    %cst_4 = arith.constant dense<0.000000e+00> : vector<8xf32>
    %15 = vector.multi_reduction <add>, %14, %cst_4 [1] : vector<8x128xf32> to vector<8xf32>
    %16 = vector.shape_cast %15 : vector<8xf32> to vector<8x1xf32>
    %cst_5 = arith.constant 0.0322580636 : f32
    %17 = vector.broadcast %cst_5 : f32 to vector<8x1xf32>
    %18 = arith.mulf %16, %17 : vector<8x1xf32>
    %19 = math.sqrt %18 : vector<8x1xf32>
    %cst_6 = arith.constant 1.000000e-07 : f32
    %20 = vector.broadcast %cst_6 : f32 to vector<8x1xf32>
    %21 = arith.addf %19, %20 : vector<8x1xf32>
    %22 = tpu.reciprocal %21 : vector<8x1xf32> -> vector<8x1xf32>
    %c0_7 = arith.constant 0 : index
    %c0_8 = arith.constant 0 : index
    %23 = vector.load %arg2[%c0_7, %c0_8] : memref<1x128xf32, #tpu.memory_space<vmem>>, vector<1x128xf32>
    %24 = vector.broadcast %9 : vector<8x1xf32> to vector<8x128xf32>
    %25 = arith.subf %0, %24 : vector<8x128xf32>
    %26 = vector.broadcast %22 : vector<8x1xf32> to vector<8x128xf32>
    %27 = arith.mulf %25, %26 : vector<8x128xf32>
    %28 = vector.broadcast %23 : vector<1x128xf32> to vector<8x128xf32>
    %29 = arith.mulf %28, %27 : vector<8x128xf32>
    %c0_9 = arith.constant 0 : index
    %c0_10 = arith.constant 0 : index
    %30 = vector.load %arg3[%c0_9, %c0_10] : memref<1x128xf32, #tpu.memory_space<vmem>>, vector<1x128xf32>
    %31 = vector.broadcast %30 : vector<1x128xf32> to vector<8x128xf32>
    %32 = arith.addf %29, %31 : vector<8x128xf32>
    %c0_11 = arith.constant 0 : index
    %c0_12 = arith.constant 0 : index
    %33 = vector.load %arg4[%c0_11, %c0_12] : memref<8x128xf32, #tpu.memory_space<vmem>>, vector<8x128xf32>
    tpu.vector_store %arg4[%c0_11, %c0_12], %32 {strides = array<i32>} : memref<8x128xf32, #tpu.memory_space<vmem>>, vector<8x128xf32>,
    return
  }
  func.func @transform_0(%arg0: i32) -> (i32, i32) {
    %c0_i32 = arith.constant 0 : i32
    %c0_i32_0 = arith.constant 0 : i32
    return %arg0, %c0_i32 : i32, i32
  }
  func.func @transform_1(%arg0: i32) -> (i32, i32) {
    %c0_i32 = arith.constant 0 : i32
    %c0_i32_0 = arith.constant 0 : i32
    %c0_i32_1 = arith.constant 0 : i32
    return %c0_i32, %c0_i32_0 : i32, i32
  }
  func.func @transform_2(%arg0: i32) -> (i32, i32) {
    %c0_i32 = arith.constant 0 : i32
    %c0_i32_0 = arith.constant 0 : i32
    %c0_i32_1 = arith.constant 0 : i32
    return %c0_i32, %c0_i32_0 : i32, i32
  }
  func.func @transform_3(%arg0: i32) -> (i32, i32) {
    %c0_i32 = arith.constant 0 : i32
    %c0_i32_0 = arith.constant 0 : i32
    return %arg0, %c0_i32 : i32, i32
  }
}

</mosaic_0001>

<llo_original>
// kernel: tpu_custom_call.1
$region0: #{tpu_custom_call.1}
  #allocation0 [shape = 'u32[]', space=smem, size = 0x4, offset = 0x4, fixed_abs, tag = 'smem constant byte address 0x4 - core index']
  #allocation1 [shape = 'u32[72,128]{1,0:T(1,128)}', space=vmem, size = 0x9000, scoped, tag = 'internal scratch']
  %s0 = inlined_call_operand.hbm [shape: f32[16,128], index: 0, kind: input, shape index: {}]
  %s1 = inlined_call_operand.hbm [shape: f32[1,128], index: 1, kind: input, shape index: {}]
  %s2 = inlined_call_operand.vmem [shape: f32[1,128], index: 2, kind: input, shape index: {}]
  %s3 = inlined_call_operand.hbm [shape: f32[16,128], index: 3, kind: output, shape index: {}]
  %s4 = sld [smem:[#allocation0]]
  $region53: #{tpu_custom_call.1} parent=0
    _
  %s6 = ssub.s32 1, %s4
  %s7 = scalar_select 0, %s6, %s4
  $region1: #{tpu_custom_call.1} parent=0
    #allocation2 [shape = 'u8[8192]{0}', space=vmem, size = 0x2000, scoped, tag = 'input window, operand 0']
    #allocation3 [shape = 's32[2]{0}', space=sflag, size = 0x8, scoped, tag = 'scoped memory for tpu_custom_call.1']
    #allocation4 [shape = 's32[2]{0}', space=sflag, size = 0x8, scoped, tag = 'scoped memory for tpu_custom_call.1']
    #allocation5 [shape = 'u8[512]{0}', space=vmem, size = 0x400, scoped, tag = 'input window, operand 1, single buffered']
    #allocation6 [shape = 's32[1]{0}', space=sflag, size = 0x4, scoped, tag = 'scoped memory for tpu_custom_call.1']
    #allocation7 [shape = 'u8[8192]{0}', space=vmem, size = 0x2000, scoped, tag = 'output window, operand 0']
    %8 = vsyncpa [#allocation3], 0
    %s9 = scalar_lea.sflag [#allocation3], 1
    %10 = vsyncpa %s9, 0
    %11 = vsyncpa [#allocation6], 0
    %12 = vsyncpa [#allocation4], 0
    %s13 = scalar_lea.sflag [#allocation4], 1
    %14 = vsyncpa %s13, 0
    loop: start=0, step=1, limit=4
    $region2: #{tpu_custom_call.1} parent=1 // loop_pre_header
      _
    $region3: #{tpu_custom_call.1} parent=1 // loop_header
      %s16 = sphi 0, %s20
      %p17 = scmp.ge.s32.totalorder %s16, 4
      %s26 = sphi 0, %s28
      %s29 = sphi 0, %s26
      %s30 = sphi 0, %s29
      %s46 = sphi 0, %s30
      %s50 = sphi 0, %s50
      %s52 = sphi 0, %s50
      %s53 = sphi 0, %s52
      %s67 = sphi 0, %s53
      %s71 = sphi 0, %s71
      %s73 = sphi 0, %s71
      %s74 = sphi 0, %s73
      %s88 = sphi 0, %s74
      %s94 = sphi 0, %s96
      %s97 = sphi 0, %s94
      %s98 = sphi 0, %s97
      %s114 = sphi 0, %s98
    $region4: #{tpu_custom_call.1} parent=1 // loop_header_branch
      %19 = sbr.rel (%p17) target = $region8
    $region5: #{tpu_custom_call.1} parent=1 // loop_body
      %s21 = ssub.s32 %s16, 1
      %s22 = ssub.s32 %s16, 2
      %s23 = sadd.s32 %s16, 1
      %s24 = ssub.s32 %s16, %s23
      %p25 = scmp.eq.s32.totalorder %s24, 0
      %s27 = sadd.s32 %s26, 1
      %s28 = scalar_select %p25, %s26, %s27
      %p31 = pneg %p25
      %p32 = scmp.eq.s32.totalorder %s16, 1
      %p33 = por %p31, %p32
      %p34 = scmp.ne.s32.totalorder %s26, %s29
      %p35 = scmp.eq.s32.totalorder %s16, 0
      %p36 = por %p34, %p35
      %p37 = scmp.ne.s32.totalorder %s26, %s29
      %p38 = scmp.eq.s32.totalorder %s21, 1
      %p39 = por %p37, %p38
      %p40 = scmp.ne.s32.totalorder %s29, %s30
      %p41 = scmp.eq.s32.totalorder %s21, 0
      %p42 = por %p40, %p41
      %p43 = scmp.ne.s32.totalorder %s29, %s30
      %p44 = scmp.eq.s32.totalorder %s22, 1
      %p45 = por %p43, %p44
      %p47 = scmp.ne.s32.totalorder %s30, %s46
      %p48 = scmp.eq.s32.totalorder %s22, 0
      %p49 = por %p47, %p48
      %s51 = sadd.s32 %s50, 1
      %p54 = scmp.eq.s32.totalorder %s16, 1
      %p55 = scmp.ne.s32.totalorder %s50, %s52
      %p56 = scmp.eq.s32.totalorder %s16, 0
      %p57 = por %p55, %p56
      %p58 = scmp.ne.s32.totalorder %s50, %s52
      %p59 = scmp.eq.s32.totalorder %s21, 1
      %p60 = por %p58, %p59
      %p61 = scmp.ne.s32.totalorder %s52, %s53
      %p62 = scmp.eq.s32.totalorder %s21, 0
      %p63 = por %p61, %p62
      %p64 = scmp.ne.s32.totalorder %s52, %s53
      %p65 = scmp.eq.s32.totalorder %s22, 1
      %p66 = por %p64, %p65
      %p68 = scmp.ne.s32.totalorder %s53, %s67
      %p69 = scmp.eq.s32.totalorder %s22, 0
      %p70 = por %p68, %p69
      %s72 = sadd.s32 %s71, 1
      %p75 = scmp.eq.s32.totalorder %s16, 1
      %p76 = scmp.ne.s32.totalorder %s71, %s73
      %p77 = scmp.eq.s32.totalorder %s16, 0
      %p78 = por %p76, %p77
      %p79 = scmp.ne.s32.totalorder %s71, %s73
      %p80 = scmp.eq.s32.totalorder %s21, 1
      %p81 = por %p79, %p80
      %p82 = scmp.ne.s32.totalorder %s73, %s74
      %p83 = scmp.eq.s32.totalorder %s21, 0
      %p84 = por %p82, %p83
      %p85 = scmp.ne.s32.totalorder %s73, %s74
      %p86 = scmp.eq.s32.totalorder %s22, 1
      %p87 = por %p85, %p86
      %p89 = scmp.ne.s32.totalorder %s74, %s88
      %p90 = scmp.eq.s32.totalorder %s22, 0
      %p91 = por %p89, %p90
      %s92 = ssub.s32 %s16, %s23
      %p93 = scmp.eq.s32.totalorder %s92, 0
      %s95 = sadd.s32 %s94, 1
      %s96 = scalar_select %p93, %s94, %s95
      %p99 = pneg %p93
      %p100 = scmp.eq.s32.totalorder %s16, 1
      %p101 = por %p99, %p100
      %p102 = scmp.ne.s32.totalorder %s94, %s97
      %p103 = scmp.eq.s32.totalorder %s16, 0
      %p104 = por %p102, %p103
      %p105 = scmp.ne.s32.totalorder %s94, %s97
      %p106 = scmp.eq.s32.totalorder %s21, 1
      %p107 = por %p105, %p106
      %p108 = scmp.ne.s32.totalorder %s97, %s98
      %p109 = scmp.eq.s32.totalorder %s21, 0
      %p110 = por %p108, %p109
      %p111 = scmp.ne.s32.totalorder %s97, %s98
      %p112 = scmp.eq.s32.totalorder %s22, 1
      %p113 = por %p111, %p112
      %p115 = scmp.ne.s32.totalorder %s98, %s114
      %p116 = scmp.eq.s32.totalorder %s22, 0
      %p117 = por %p115, %p116
      %p118 = scmp.le.s32.totalorder 1, %s16
      %p119 = scmp.lt.s32.totalorder %s16, 3
      %p120 = pnand %p118, %p119
      %p121 = pneg %p120
      // Predicated region
      $region9: #{tpu_custom_call.1} parent=5 // pred_check
        _
      $region10: #{tpu_custom_call.1} parent=5 // pred_check_branch
        %123 = sbr.rel (%p120) target = $region12
      $region11: #{tpu_custom_call.1} parent=5 // pred_region
        %s124 = ssub.s32 %s16, 1
        // Predicated region
        $region13: #{tpu_custom_call.1} parent=11 // pred_check
          %p125 = pneg %p63
        $region14: #{tpu_custom_call.1} parent=11 // pred_check_branch
          %127 = sbr.rel (%p125) target = $region16
        $region15: #{tpu_custom_call.1} parent=11 // pred_region
          %129 = vsyncadd [#allocation6], 0
          %s131 = sshll.u32 %s1, 4
          %s132 = int_to_ptr.hbm [resolvable:$true] %s131
          %s133 = sshll.u32 [#allocation5], 4
          %s134 = int_to_ptr.vmem [resolvable:$true] %s133
          %136 = dma.hbm_to_vmem [thread:$0]  %s132, 16, %s134, [#allocation6]
        $region16: #{tpu_custom_call.1} parent=11 // pred_fallthru
          _
        // Predicated region
        $region17: #{tpu_custom_call.1} parent=11 // pred_check
          %p137 = pneg %p84
        $region18: #{tpu_custom_call.1} parent=11 // pred_check_branch
          %139 = sbr.rel (%p137) target = $region20
        $region19: #{tpu_custom_call.1} parent=11 // pred_region
          _
        $region20: #{tpu_custom_call.1} parent=11 // pred_fallthru
          _
      $region12: #{tpu_custom_call.1} parent=5 // pred_fallthru
        _
      %p140 = scmp.lt.s32.totalorder %s16, 2
      // Predicated region
      $region21: #{tpu_custom_call.1} parent=5 // pred_check
        %p141 = pneg %p140
      $region22: #{tpu_custom_call.1} parent=5 // pred_check_branch
        %143 = sbr.rel (%p141) target = $region24
      $region23: #{tpu_custom_call.1} parent=5 // pred_region
        // Predicated region
        $region25: #{tpu_custom_call.1} parent=23 // pred_check
          %p144 = pneg %p36
        $region26: #{tpu_custom_call.1} parent=23 // pred_check_branch
          %146 = sbr.rel (%p144) target = $region28
        $region27: #{tpu_custom_call.1} parent=23 // pred_region
          %s147 = sand.u32 %s26, 1
          %s148 = scalar_lea.sflag [#allocation3], %s147
          %s149 = sand.u32 %s26, 1
          %s150 = smul.addr %s149, 8
          %s151 = scalar_lea.vmem [#allocation2], %s150
          %153 = vsyncadd %s148, 0
          %s154 = smul.addr %s16, 8
          %s155 = scalar_lea.hbm %s0, %s154
          %s157 = sshll.u32 %s155, 4
          %s158 = int_to_ptr.hbm [resolvable:$true] %s157
          %s159 = sshll.u32 %s151, 4
          %s160 = int_to_ptr.vmem [resolvable:$true] %s159
          %162 = dma.hbm_to_vmem [thread:$0]  %s158, 128, %s160, %s148
        $region28: #{tpu_custom_call.1} parent=23 // pred_fallthru
          _
      $region24: #{tpu_custom_call.1} parent=5 // pred_fallthru
        _
      %p163 = scmp.le.s32.totalorder 1, %s16
      %p164 = scmp.lt.s32.totalorder %s16, 3
      %p165 = pnand %p163, %p164
      %p166 = pneg %p165
      // Predicated region
      $region29: #{tpu_custom_call.1} parent=5 // pred_check
        _
      $region30: #{tpu_custom_call.1} parent=5 // pred_check_branch
        %168 = sbr.rel (%p165) target = $region32
      $region31: #{tpu_custom_call.1} parent=5 // pred_region
        %s169 = ssub.s32 %s16, 1
        %s170 = sand.u32 %s29, 1
        %s171 = scalar_lea.sflag [#allocation3], %s170
        %s172 = sand.u32 %s29, 1
        %s173 = smul.addr %s172, 8
        %s174 = scalar_lea.vmem [#allocation2], %s173
        // Predicated region
        $region33: #{tpu_custom_call.1} parent=31 // pred_check
          %p175 = pneg %p42
        $region34: #{tpu_custom_call.1} parent=31 // pred_check_branch
          %177 = sbr.rel (%p175) target = $region36
        $region35: #{tpu_custom_call.1} parent=31 // pred_region
          %179 = dma.done %s171, 128
        $region36: #{tpu_custom_call.1} parent=31 // pred_fallthru
          _
        // Predicated region
        $region37: #{tpu_custom_call.1} parent=31 // pred_check
          %p180 = pneg %p63
        $region38: #{tpu_custom_call.1} parent=31 // pred_check_branch
          %182 = sbr.rel (%p180) target = $region40
        $region39: #{tpu_custom_call.1} parent=31 // pred_region
          %184 = dma.done [#allocation6], 16
        $region40: #{tpu_custom_call.1} parent=31 // pred_fallthru
          _
        %s185 = sand.u32 %s29, 1
        %s186 = scalar_lea.sflag [#allocation3], %s185
        %s187 = sand.u32 %s29, 1
        %s188 = smul.addr %s187, 8
        %s189 = scalar_lea.vmem [#allocation2], %s188
        %p190 = pneg %p42
        %p191 = pneg %p39
        %p192 = pneg %p63
        %p193 = pneg %p60
        %p194 = pneg %p84
        %p195 = pneg %p81
        %p196 = pneg %p110
        %p197 = pneg %p107
        %s198 = sand.u32 %s97, 1
        %s199 = scalar_lea.sflag [#allocation4], %s198
        %s200 = sand.u32 %s97, 1
        %s201 = smul.addr %s200, 8
        %s202 = scalar_lea.vmem [#allocation7], %s201
        %v203 = vld [vmem:[%s174] sm:$0xff]
        %v204 = vlaneseq
        %v205 = vand.u32 %v204, 127
        %vm206 = vcmp.lt.s32.totalorder %v205, 32
        %v207 = vsel %vm206, %v203, 0.0
        %208 = vadd.xlane.f32.xlu0 %v207
        %v209 = vpop.xlane.xlu0 %208
        %v210 = vmul.f32 %v209, 0.03125
        %v211 = vsub.f32 %v203, %v210
        %v212 = vsel %vm206, %v211, 0.0
        %v213 = vmul.f32 %v212, %v212
        %214 = vadd.xlane.f32.xlu0 %v213
        %v215 = vpop.xlane.xlu0 %214
        %v216 = vmul.f32 %v215, 0.032258064
        %v217 = vrsqrt.pop %v216
        %v218 = vmul.f32 %v217, %v216
        %v219 = vmul.f32 %v218, %v217
        %v220 = vmul.f32 0.5, %v219
        %v221 = vsub.f32 1.5, %v220
        %v222 = vmul.f32 %v217, %v221
        %v223 = vmul.f32 %v216, %v222
        %vm224 = vcmp.eq.f32.partialorder %v216, inf
        %v225 = vsel %vm224, %v216, %v223
        %vm226 = vcmp.eq.f32.partialorder %v216, 0.0
        %v227 = vand.u32 %v216, 2147483648
        %v228 = vsel %vm226, %v227, %v225
        %v229 = vadd.f32 %v228, 1e-07
        %v230 = vrcp.pop %v229
        %v231 = vmul.f32 %v229, %v230
        %v232 = vsub.f32 1.0, %v231
        %v233 = vmul.f32 %v230, %v232
        %v234 = vadd.f32 %v230, %v233
        %vm235 = vweird.f32 %v229
        %vm236 = vweird.f32 %v230
        %vm237 = vmor %vm235, %vm236
        %v238 = vsel %vm237, %v230, %v234
        %v239 = vand.u32 2147483647, %v229
        %vm240 = vcmp.eq.f32.partialorder %v239, 8.507059e+37
        %v241 = vand.u32 %v229, 2147483648
        %v242 = vor.u32 1.1754944e-38, %v241
        %v243 = vsel %vm240, %v242, %v238
        %v244 = vld [vmem:[#allocation5] sm:$0x1]
        %v245 = vmul.f32 %v211, %v243
        %v247 = vperm.slane %v244, 0
        %v249 = vmul.f32 %v247, %v245
        %v250 = vld [vmem:[%s2] sm:$0x1]
        %v252 = vperm.slane %v250, 0
        %v254 = vadd.f32 %v249, %v252
        %255 = vst [vmem:[%s202] sm:$0xff] %v254
        %s256 = sand.u32 %s97, 1
        %s257 = scalar_lea.sflag [#allocation4], %s256
        %s258 = sand.u32 %s97, 1
        %s259 = smul.addr %s258, 8
        %s260 = scalar_lea.vmem [#allocation7], %s259
        // Predicated region
        $region41: #{tpu_custom_call.1} parent=31 // pred_check
          %p261 = pneg %p107
        $region42: #{tpu_custom_call.1} parent=31 // pred_check_branch
          %263 = sbr.rel (%p261) target = $region44
        $region43: #{tpu_custom_call.1} parent=31 // pred_region
          %265 = vsyncadd %s257, 0
          %s266 = smul.addr %s21, 8
          %s267 = scalar_lea.hbm %s3, %s266
          %s269 = sshll.u32 %s260, 4
          %s270 = int_to_ptr.vmem [resolvable:$true] %s269
          %s271 = sshll.u32 %s267, 4
          %s272 = int_to_ptr.hbm [resolvable:$true] %s271
          %274 = dma.vmem_to_hbm [thread:$0]  %s270, 128, %s272, %s257
        $region44: #{tpu_custom_call.1} parent=31 // pred_fallthru
          _
      $region32: #{tpu_custom_call.1} parent=5 // pred_fallthru
        _
      %p275 = scmp.le.s32.totalorder 2, %s16
      // Predicated region
      $region45: #{tpu_custom_call.1} parent=5 // pred_check
        %p276 = pneg %p275
      $region46: #{tpu_custom_call.1} parent=5 // pred_check_branch
        %278 = sbr.rel (%p276) target = $region48
      $region47: #{tpu_custom_call.1} parent=5 // pred_region
        %s279 = ssub.s32 %s16, 2
        // Predicated region
        $region49: #{tpu_custom_call.1} parent=47 // pred_check
          %p280 = pneg %p113
        $region50: #{tpu_custom_call.1} parent=47 // pred_check_branch
          %282 = sbr.rel (%p280) target = $region52
        $region51: #{tpu_custom_call.1} parent=47 // pred_region
          %s283 = sand.u32 %s98, 1
          %s284 = scalar_lea.sflag [#allocation4], %s283
          %s285 = sand.u32 %s98, 1
          %s286 = smul.addr %s285, 8
          %s287 = scalar_lea.vmem [#allocation7], %s286
          %289 = dma.done %s284, 128
        $region52: #{tpu_custom_call.1} parent=47 // pred_fallthru
          _
      $region48: #{tpu_custom_call.1} parent=5 // pred_fallthru
        _
    $region6: #{tpu_custom_call.1} parent=1 // loop_footer
      %s20 = sadd.s32 1, %s16
    $region7: #{tpu_custom_call.1} parent=1 // loop_footer_branch
      %15 = sbr.rel target = $region3
    $region8: #{tpu_custom_call.1} parent=1 // loop_exit
      _
    %290 = vsyncpa [#allocation3], 1
    %s291 = scalar_lea.sflag [#allocation3], 1
    %292 = vsyncpa %s291, 1
    %293 = vsyncpa [#allocation6], 1
    %294 = vsyncpa [#allocation4], 1
    %s295 = scalar_lea.sflag [#allocation4], 1
    %296 = vsyncpa %s295, 1

</llo_original>
